<compile_context>
chip_gen: v7x
topology: tpu7x:2x2x1
jax: 0.10.0
libtpu: 0.0.40
codegen_flags: <defaults>
</compile_context>

<pallas_src>
import functools

import jax
import jax.numpy as jnp
from jax.experimental import pallas as pl
from jax.experimental.pallas import tpu as pltpu

LEAKY_SLOPE = 0.2
BN_EPS = 1e-5

_VMEM_SPEC = pl.BlockSpec(memory_space=pltpu.MemorySpace.VMEM)


# ----------------------------- Pallas kernels ------------------------------ #

def _leaky_relu(v):
    return jnp.where(v > 0, v, LEAKY_SLOPE * v)


def _conv_bias(w_ref, p_ref, b_ref):
    """Conv as transposed matmul: (Cout, K) @ (K, M) + bias, f32 accumulate."""
    y = jnp.dot(w_ref[...], p_ref[...], preferred_element_type=jnp.float32)
    return y + b_ref[...]


def _batchnorm(y, g_ref, be_ref):
    """Training-mode BatchNorm over the M (= N*OH*OW) columns, f32, in-kernel."""
    mu = jnp.mean(y, axis=1, keepdims=True)
    d = y - mu
    var = jnp.mean(d * d, axis=1, keepdims=True)            # biased variance
    inv = jax.lax.rsqrt(var + BN_EPS)
    scale = g_ref[...] * inv
    shift = be_ref[...] - mu * scale
    return y * scale + shift


def _conv_lrelu_kernel(w_ref, p_ref, b_ref, o_ref):
    """Layer 1: conv + bias + LeakyReLU (no BN)."""
    o_ref[...] = _leaky_relu(_conv_bias(w_ref, p_ref, b_ref)).astype(o_ref.dtype)


def _conv_bn_lrelu_kernel(w_ref, p_ref, b_ref, g_ref, be_ref, o_ref):
    """Layer 2: conv + bias + BatchNorm + LeakyReLU, fully fused."""
    y = _conv_bias(w_ref, p_ref, b_ref)
    o_ref[...] = _leaky_relu(_batchnorm(y, g_ref, be_ref)).astype(o_ref.dtype)


def _conv_bn_lrelu_sig_mean_kernel(w_ref, p_ref, b_ref, g_ref, be_ref,
                                   avg_ref, o_ref):
    """Layer 3: conv + bias + BN + LeakyReLU + sigmoid + per-image mean."""
    y = _conv_bias(w_ref, p_ref, b_ref)
    z = _leaky_relu(_batchnorm(y, g_ref, be_ref))
    z = 1.0 / (1.0 + jnp.exp(-z))                            # sigmoid (EUP exp)
    # Per-image spatial mean as one small MXU matmul: (Cout, M) @ (M, N).
    o_ref[...] = jnp.dot(z, avg_ref[...], preferred_element_type=jnp.float32)


# ------------------------------ JAX glue code ------------------------------ #

def _im2col_t(a_cnhw, kh, kw, stride, pad):
    """Channel-first transposed im2col: (K, M), K=(ky,kx,c) c-minor, M=(n,oy,ox)."""
    c, n, h, w = a_cnhw.shape
    ap = jnp.pad(a_cnhw, ((0, 0), (0, 0), (pad, pad), (pad, pad)))
    oh = (h + 2 * pad - kh) // stride + 1
    ow = (w + 2 * pad - kw) // stride + 1
    slices = []
    for ky in range(kh):
        for kx in range(kw):
            slices.append(ap[:, :, ky:ky + stride * oh:stride,
                             kx:kx + stride * ow:stride])
    p = jnp.stack(slices, axis=0)                            # (kh*kw, C, N, OH, OW)
    return p.reshape(kh * kw * c, n * oh * ow), oh, ow


def _weight_t(w_oihw):
    """(Cout, Cin, kh, kw) -> (Cout, kh*kw*Cin) matching _im2col_t ordering."""
    cout = w_oihw.shape[0]
    return jnp.transpose(w_oihw, (0, 2, 3, 1)).reshape(cout, -1)


def _call(kernel, out_shape, *args):
    """Un-gridded pallas_call: every operand fully resident in VMEM."""
    return pl.pallas_call(
        kernel,
        out_shape=out_shape,
        in_specs=[_VMEM_SPEC] * len(args),
        out_specs=_VMEM_SPEC,
    )(*args)


def _col(v):
    return v.reshape(-1, 1).astype(jnp.float32)


def dcgan_discriminator_forward(x_nchw, params, *, compute_dtype=jnp.bfloat16):
    n = x_nchw.shape[0]
    a = jnp.transpose(x_nchw, (1, 0, 2, 3)).astype(compute_dtype)   # (C, N, H, W)

    # ---- layer 1: conv1 + LeakyReLU (no BN) ----
    c1 = params["w1"].shape[0]
    p1, oh1, ow1 = _im2col_t(a, 5, 5, 2, 2)
    y1 = _call(_conv_lrelu_kernel,
               jax.ShapeDtypeStruct((c1, n * oh1 * ow1), compute_dtype),
               _weight_t(params["w1"]).astype(compute_dtype),
               p1.astype(compute_dtype),
               _col(params["b1"]))
    a1 = y1.reshape(c1, n, oh1, ow1)                                # channel-first

    # ---- layer 2: conv2 + BN2 + LeakyReLU (one fused kernel) ----
    c2 = params["w2"].shape[0]
    p2, oh2, ow2 = _im2col_t(a1, 5, 5, 2, 2)
    y2 = _call(_conv_bn_lrelu_kernel,
               jax.ShapeDtypeStruct((c2, n * oh2 * ow2), compute_dtype),
               _weight_t(params["w2"]).astype(compute_dtype),
               p2.astype(compute_dtype),
               _col(params["b2"]), _col(params["g2"]), _col(params["be2"]))
    a2 = y2.reshape(c2, n, oh2, ow2)

    # ---- layer 3: conv3 + BN3 + LeakyReLU + sigmoid + spatial mean ----
    c3 = params["w3"].shape[0]
    p3, oh3, ow3 = _im2col_t(a2, 5, 5, 2, 2)
    spatial = oh3 * ow3
    img_id = jnp.arange(n * spatial, dtype=jnp.int32) // spatial
    avg = (img_id[:, None] == jnp.arange(n, dtype=jnp.int32)[None, :])
    avg = avg.astype(jnp.float32) / jnp.float32(spatial)            # (M3, N)
    out_t = _call(_conv_bn_lrelu_sig_mean_kernel,
                  jax.ShapeDtypeStruct((c3, n), jnp.float32),
                  _weight_t(params["w3"]).astype(compute_dtype),
                  p3.astype(compute_dtype),
                  _col(params["b3"]), _col(params["g3"]), _col(params["be3"]),
                  avg)
    return out_t.T                                                  # (N, featmap_dim)


# ---------------------------- reference (pure JAX) -------------------------- #

def _ref_forward(x_nchw, params):
    def conv(x, w, b):
        y = jax.lax.conv_general_dilated(
            x, w, (2, 2), ((2, 2), (2, 2)),
            dimension_numbers=("NCHW", "OIHW", "NCHW"))
        return y + b.reshape(1, -1, 1, 1)

    def bn(x, g, be):
        mu = jnp.mean(x, axis=(0, 2, 3), keepdims=True)
        var = jnp.mean((x - mu) ** 2, axis=(0, 2, 3), keepdims=True)
        return ((x - mu) * jax.lax.rsqrt(var + BN_EPS)
                * g.reshape(1, -1, 1, 1) + be.reshape(1, -1, 1, 1))

    lr = lambda v: jnp.where(v > 0, v, LEAKY_SLOPE * v)
    h = lr(conv(x_nchw, params["w1"], params["b1"]))
    h = lr(bn(conv(h, params["w2"], params["b2"]), params["g2"], params["be2"]))
    h = lr(bn(conv(h, params["w3"], params["b3"]), params["g3"], params["be3"]))
    h = jax.nn.sigmoid(h)
    return h.mean(axis=3).mean(axis=2)


# --------------------------------- main ------------------------------------ #

if __name__ == "__main__":
    # Small shapes: featmap_dim=32 (channels 8 -> 16 -> 32), n_channel=1,
    # input image 16x16, batch 2.
    featmap_dim = 32
    n_channel = 1
    N, H, W = 2, 16, 16
    c1, c2, c3 = featmap_dim // 4, featmap_dim // 2, featmap_dim

    key = jax.random.PRNGKey(0)
    ks = jax.random.split(key, 11)
    params = {
        "w1": 0.05 * jax.random.normal(ks[0], (c1, n_channel, 5, 5), jnp.float32),
        "b1": 0.05 * jax.random.normal(ks[1], (c1,), jnp.float32),
        "w2": 0.05 * jax.random.normal(ks[2], (c2, c1, 5, 5), jnp.float32),
        "b2": 0.05 * jax.random.normal(ks[3], (c2,), jnp.float32),
        "g2": 1.0 + 0.1 * jax.random.normal(ks[4], (c2,), jnp.float32),
        "be2": 0.1 * jax.random.normal(ks[5], (c2,), jnp.float32),
        "w3": 0.05 * jax.random.normal(ks[6], (c3, c2, 5, 5), jnp.float32),
        "b3": 0.05 * jax.random.normal(ks[7], (c3,), jnp.float32),
        "g3": 1.0 + 0.1 * jax.random.normal(ks[8], (c3,), jnp.float32),
        "be3": 0.1 * jax.random.normal(ks[9], (c3,), jnp.float32),
    }
    x = jax.random.normal(ks[10], (N, n_channel, H, W), jnp.float32)

    fwd_bf16 = jax.jit(functools.partial(dcgan_discriminator_forward,
                                         compute_dtype=jnp.bfloat16))
    fwd_f32 = jax.jit(functools.partial(dcgan_discriminator_forward,
                                        compute_dtype=jnp.float32))

    out_bf16 = jax.block_until_ready(fwd_bf16(x, params))
    out_f32 = jax.block_until_ready(fwd_f32(x, params))
    ref = jax.block_until_ready(_ref_forward(x, params))

    assert out_bf16.shape == (N, featmap_dim), out_bf16.shape
    assert jnp.allclose(out_f32, ref, atol=1e-3, rtol=1e-3), \
        f"f32 path max abs diff {jnp.max(jnp.abs(out_f32 - ref))}"
    assert jnp.allclose(out_bf16, ref, atol=3e-2, rtol=3e-2), \
        f"bf16 path max abs diff {jnp.max(jnp.abs(out_bf16 - ref))}"
    print("KERNEL_OK")
</pallas_src>

<mosaic_0001>
module attributes {stable_mosaic.version = 11 : i64} {
  func.func @_conv_lrelu_kernel(%arg0: memref<8x25xbf16, #tpu.memory_space<vmem>>, %arg1: memref<25x128xbf16, #tpu.memory_space<vmem>>, %arg2: memref<8x1xf32, #tpu.memory_space<vmem>>, %arg3: memref<8x128xbf16, #tpu.memory_space<vmem>>) attributes {dimension_semantics = [], scalar_prefetch = 0 : i64, scratch_operands = 0 : i64, tpu.core_type = #tpu.core_type<tc>} {
    %c0 = arith.constant 0 : index
    %c0_0 = arith.constant 0 : index
    %0 = vector.load %arg0[%c0, %c0_0] : memref<8x25xbf16, #tpu.memory_space<vmem>>, vector<8x25xbf16>
    %c0_1 = arith.constant 0 : index
    %c0_2 = arith.constant 0 : index
    %1 = vector.load %arg1[%c0_1, %c0_2] : memref<25x128xbf16, #tpu.memory_space<vmem>>, vector<25x128xbf16>
    %cst = arith.constant dense<0.000000e+00> : vector<8x128xf32>
    %2 = tpu.matmul %0, %1, %cst {dimension_numbers = #tpu.dot_dimension_numbers<[1], [0], [0], [1], [0, 0, 1, 1], [], []>} : vector<8x25xbf16>, vector<25x128xbf16>, vector<8x128xf32> -> vector<8x128xf32>
    %c0_3 = arith.constant 0 : index
    %c0_4 = arith.constant 0 : index
    %3 = vector.load %arg2[%c0_3, %c0_4] : memref<8x1xf32, #tpu.memory_space<vmem>>, vector<8x1xf32>
    %4 = vector.broadcast %3 : vector<8x1xf32> to vector<8x128xf32>
    %5 = arith.addf %2, %4 : vector<8x128xf32>
    %cst_5 = arith.constant 0.000000e+00 : f32
    %6 = vector.broadcast %cst_5 : f32 to vector<8x128xf32>
    %7 = arith.cmpf ogt, %5, %6 : vector<8x128xf32>
    %cst_6 = arith.constant 2.000000e-01 : f32
    %8 = vector.broadcast %cst_6 : f32 to vector<8x128xf32>
    %9 = arith.mulf %8, %5 : vector<8x128xf32>
    %10 = arith.select %7, %5, %9 : vector<8x128xi1>, vector<8x128xf32>
    %11 = arith.truncf %10 : vector<8x128xf32> to vector<8x128xbf16>
    %c0_7 = arith.constant 0 : index
    %c0_8 = arith.constant 0 : index
    %12 = vector.load %arg3[%c0_7, %c0_8] : memref<8x128xbf16, #tpu.memory_space<vmem>>, vector<8x128xbf16>
    tpu.vector_store %arg3[%c0_7, %c0_8], %11 {strides = array<i32>} : memref<8x128xbf16, #tpu.memory_space<vmem>>, vector<8x128xbf16>,
    return
  }
}

module attributes {stable_mosaic.version = 11 : i64} {
  func.func @_conv_bn_lrelu_kernel(%arg0: memref<16x200xbf16, #tpu.memory_space<vmem>>, %arg1: memref<200x32xbf16, #tpu.memory_space<vmem>>, %arg2: memref<16x1xf32, #tpu.memory_space<vmem>>, %arg3: memref<16x1xf32, #tpu.memory_space<vmem>>, %arg4: memref<16x1xf32, #tpu.memory_space<vmem>>, %arg5: memref<16x32xbf16, #tpu.memory_space<vmem>>) attributes {dimension_semantics = [], scalar_prefetch = 0 : i64, scratch_operands = 0 : i64, tpu.core_type = #tpu.core_type<tc>} {
    %c0 = arith.constant 0 : index
    %c0_0 = arith.constant 0 : index
    %0 = vector.load %arg0[%c0, %c0_0] : memref<16x200xbf16, #tpu.memory_space<vmem>>, vector<16x200xbf16>
    %c0_1 = arith.constant 0 : index
    %c0_2 = arith.constant 0 : index
    %1 = vector.load %arg1[%c0_1, %c0_2] : memref<200x32xbf16, #tpu.memory_space<vmem>>, vector<200x32xbf16>
    %cst = arith.constant dense<0.000000e+00> : vector<16x32xf32>
    %2 = tpu.matmul %0, %1, %cst {dimension_numbers = #tpu.dot_dimension_numbers<[1], [0], [0], [1], [0, 0, 1, 1], [], []>} : vector<16x200xbf16>, vector<200x32xbf16>, vector<16x32xf32> -> vector<16x32xf32>
    %c0_3 = arith.constant 0 : index
    %c0_4 = arith.constant 0 : index
    %3 = vector.load %arg2[%c0_3, %c0_4] : memref<16x1xf32, #tpu.memory_space<vmem>>, vector<16x1xf32>
    %4 = vector.broadcast %3 : vector<16x1xf32> to vector<16x32xf32>
    %5 = arith.addf %2, %4 : vector<16x32xf32>
    %cst_5 = arith.constant dense<0.000000e+00> : vector<16xf32>
    %6 = vector.multi_reduction <add>, %5, %cst_5 [1] : vector<16x32xf32> to vector<16xf32>
    %7 = vector.shape_cast %6 : vector<16xf32> to vector<16x1xf32>
    %cst_6 = arith.constant 3.200000e+01 : f32
    %8 = vector.broadcast %cst_6 : f32 to vector<16x1xf32>
    %9 = arith.divf %7, %8 : vector<16x1xf32>
    %10 = vector.broadcast %9 : vector<16x1xf32> to vector<16x32xf32>
    %11 = arith.subf %5, %10 : vector<16x32xf32>
    %12 = arith.mulf %11, %11 : vector<16x32xf32>
    %cst_7 = arith.constant dense<0.000000e+00> : vector<16xf32>
    %13 = vector.multi_reduction <add>, %12, %cst_7 [1] : vector<16x32xf32> to vector<16xf32>
    %14 = vector.shape_cast %13 : vector<16xf32> to vector<16x1xf32>
    %cst_8 = arith.constant 3.200000e+01 : f32
    %15 = vector.broadcast %cst_8 : f32 to vector<16x1xf32>
    %16 = arith.divf %14, %15 : vector<16x1xf32>
    %cst_9 = arith.constant 9.99999974E-6 : f32
    %17 = vector.broadcast %cst_9 : f32 to vector<16x1xf32>
    %18 = arith.addf %16, %17 : vector<16x1xf32>
    %19 = math.rsqrt %18 : vector<16x1xf32>
    %c0_10 = arith.constant 0 : index
    %c0_11 = arith.constant 0 : index
    %20 = vector.load %arg3[%c0_10, %c0_11] : memref<16x1xf32, #tpu.memory_space<vmem>>, vector<16x1xf32>
    %21 = arith.mulf %20, %19 : vector<16x1xf32>
    %c0_12 = arith.constant 0 : index
    %c0_13 = arith.constant 0 : index
    %22 = vector.load %arg4[%c0_12, %c0_13] : memref<16x1xf32, #tpu.memory_space<vmem>>, vector<16x1xf32>
    %23 = arith.mulf %9, %21 : vector<16x1xf32>
    %24 = arith.subf %22, %23 : vector<16x1xf32>
    %25 = vector.broadcast %21 : vector<16x1xf32> to vector<16x32xf32>
    %26 = arith.mulf %5, %25 : vector<16x32xf32>
    %27 = vector.broadcast %24 : vector<16x1xf32> to vector<16x32xf32>
    %28 = arith.addf %26, %27 : vector<16x32xf32>
    %cst_14 = arith.constant 0.000000e+00 : f32
    %29 = vector.broadcast %cst_14 : f32 to vector<16x32xf32>
    %30 = arith.cmpf ogt, %28, %29 : vector<16x32xf32>
    %cst_15 = arith.constant 2.000000e-01 : f32
    %31 = vector.broadcast %cst_15 : f32 to vector<16x32xf32>
    %32 = arith.mulf %31, %28 : vector<16x32xf32>
    %33 = arith.select %30, %28, %32 : vector<16x32xi1>, vector<16x32xf32>
    %34 = arith.truncf %33 : vector<16x32xf32> to vector<16x32xbf16>
    %c0_16 = arith.constant 0 : index
    %c0_17 = arith.constant 0 : index
    %35 = vector.load %arg5[%c0_16, %c0_17] : memref<16x32xbf16, #tpu.memory_space<vmem>>, vector<16x32xbf16>
    tpu.vector_store %arg5[%c0_16, %c0_17], %34 {strides = array<i32>} : memref<16x32xbf16, #tpu.memory_space<vmem>>, vector<16x32xbf16>,
    return
  }
}

module attributes {stable_mosaic.version = 11 : i64} {
  func.func @_conv_bn_lrelu_sig_mean_kernel(%arg0: memref<32x400xbf16, #tpu.memory_space<vmem>>, %arg1: memref<400x8xbf16, #tpu.memory_space<vmem>>, %arg2: memref<32x1xf32, #tpu.memory_space<vmem>>, %arg3: memref<32x1xf32, #tpu.memory_space<vmem>>, %arg4: memref<32x1xf32, #tpu.memory_space<vmem>>, %arg5: memref<8x2xf32, #tpu.memory_space<vmem>>, %arg6: memref<32x2xf32, #tpu.memory_space<vmem>>) attributes {dimension_semantics = [], scalar_prefetch = 0 : i64, scratch_operands = 0 : i64, tpu.core_type = #tpu.core_type<tc>} {
    %c0 = arith.constant 0 : index
    %c0_0 = arith.constant 0 : index
    %0 = vector.load %arg0[%c0, %c0_0] : memref<32x400xbf16, #tpu.memory_space<vmem>>, vector<32x400xbf16>
    %c0_1 = arith.constant 0 : index
    %c0_2 = arith.constant 0 : index
    %1 = vector.load %arg1[%c0_1, %c0_2] : memref<400x8xbf16, #tpu.memory_space<vmem>>, vector<400x8xbf16>
    %cst = arith.constant dense<0.000000e+00> : vector<32x8xf32>
    %2 = tpu.matmul %0, %1, %cst {dimension_numbers = #tpu.dot_dimension_numbers<[1], [0], [0], [1], [0, 0, 1, 1], [], []>} : vector<32x400xbf16>, vector<400x8xbf16>, vector<32x8xf32> -> vector<32x8xf32>
    %c0_3 = arith.constant 0 : index
    %c0_4 = arith.constant 0 : index
    %3 = vector.load %arg2[%c0_3, %c0_4] : memref<32x1xf32, #tpu.memory_space<vmem>>, vector<32x1xf32>
    %4 = vector.broadcast %3 : vector<32x1xf32> to vector<32x8xf32>
    %5 = arith.addf %2, %4 : vector<32x8xf32>
    %cst_5 = arith.constant dense<0.000000e+00> : vector<32xf32>
    %6 = vector.multi_reduction <add>, %5, %cst_5 [1] : vector<32x8xf32> to vector<32xf32>
    %7 = vector.shape_cast %6 : vector<32xf32> to vector<32x1xf32>
    %cst_6 = arith.constant 8.000000e+00 : f32
    %8 = vector.broadcast %cst_6 : f32 to vector<32x1xf32>
    %9 = arith.divf %7, %8 : vector<32x1xf32>
    %10 = vector.broadcast %9 : vector<32x1xf32> to vector<32x8xf32>
    %11 = arith.subf %5, %10 : vector<32x8xf32>
    %12 = arith.mulf %11, %11 : vector<32x8xf32>
    %cst_7 = arith.constant dense<0.000000e+00> : vector<32xf32>
    %13 = vector.multi_reduction <add>, %12, %cst_7 [1] : vector<32x8xf32> to vector<32xf32>
    %14 = vector.shape_cast %13 : vector<32xf32> to vector<32x1xf32>
    %cst_8 = arith.constant 8.000000e+00 : f32
    %15 = vector.broadcast %cst_8 : f32 to vector<32x1xf32>
    %16 = arith.divf %14, %15 : vector<32x1xf32>
    %cst_9 = arith.constant 9.99999974E-6 : f32
    %17 = vector.broadcast %cst_9 : f32 to vector<32x1xf32>
    %18 = arith.addf %16, %17 : vector<32x1xf32>
    %19 = math.rsqrt %18 : vector<32x1xf32>
    %c0_10 = arith.constant 0 : index
    %c0_11 = arith.constant 0 : index
    %20 = vector.load %arg3[%c0_10, %c0_11] : memref<32x1xf32, #tpu.memory_space<vmem>>, vector<32x1xf32>
    %21 = arith.mulf %20, %19 : vector<32x1xf32>
    %c0_12 = arith.constant 0 : index
    %c0_13 = arith.constant 0 : index
    %22 = vector.load %arg4[%c0_12, %c0_13] : memref<32x1xf32, #tpu.memory_space<vmem>>, vector<32x1xf32>
    %23 = arith.mulf %9, %21 : vector<32x1xf32>
    %24 = arith.subf %22, %23 : vector<32x1xf32>
    %25 = vector.broadcast %21 : vector<32x1xf32> to vector<32x8xf32>
    %26 = arith.mulf %5, %25 : vector<32x8xf32>
    %27 = vector.broadcast %24 : vector<32x1xf32> to vector<32x8xf32>
    %28 = arith.addf %26, %27 : vector<32x8xf32>
    %cst_14 = arith.constant 0.000000e+00 : f32
    %29 = vector.broadcast %cst_14 : f32 to vector<32x8xf32>
    %30 = arith.cmpf ogt, %28, %29 : vector<32x8xf32>
    %cst_15 = arith.constant 2.000000e-01 : f32
    %31 = vector.broadcast %cst_15 : f32 to vector<32x8xf32>
    %32 = arith.mulf %31, %28 : vector<32x8xf32>
    %33 = arith.select %30, %28, %32 : vector<32x8xi1>, vector<32x8xf32>
    %cst_16 = arith.constant 0.000000e+00 : f32
    %34 = vector.broadcast %cst_16 : f32 to vector<32x8xf32>
    %35 = arith.subf %34, %33 : vector<32x8xf32>
    %36 = math.exp %35 : vector<32x8xf32>
    %cst_17 = arith.constant 1.000000e+00 : f32
    %37 = vector.broadcast %cst_17 : f32 to vector<32x8xf32>
    %38 = arith.addf %37, %36 : vector<32x8xf32>
    %cst_18 = arith.constant 1.000000e+00 : f32
    %39 = vector.broadcast %cst_18 : f32 to vector<32x8xf32>
    %40 = arith.divf %39, %38 : vector<32x8xf32>
    %c0_19 = arith.constant 0 : index
    %c0_20 = arith.constant 0 : index
    %41 = vector.load %arg5[%c0_19, %c0_20] : memref<8x2xf32, #tpu.memory_space<vmem>>, vector<8x2xf32>
    %cst_21 = arith.constant dense<0.000000e+00> : vector<32x2xf32>
    %42 = tpu.matmul %40, %41, %cst_21 {dimension_numbers = #tpu.dot_dimension_numbers<[1], [0], [0], [1], [0, 0, 1, 1], [], []>} : vector<32x8xf32>, vector<8x2xf32>, vector<32x2xf32> -> vector<32x2xf32>
    %c0_22 = arith.constant 0 : index
    %c0_23 = arith.constant 0 : index
    %43 = vector.load %arg6[%c0_22, %c0_23] : memref<32x2xf32, #tpu.memory_space<vmem>>, vector<32x2xf32>
    tpu.vector_store %arg6[%c0_22, %c0_23], %42 {strides = array<i32>} : memref<32x2xf32, #tpu.memory_space<vmem>>, vector<32x2xf32>,
    return
  }
}

</mosaic_0001>

<llo_original>
// kernel: dcgan_discriminator_forward.3
$region0: #{dcgan_discriminator_forward.3}
  #allocation0 [shape = 'u32[]', space=smem, size = 0x4, offset = 0x4, fixed_abs, tag = 'smem constant byte address 0x4 - core index']
  #allocation1 [shape = 'u32[144,128]{1,0:T(1,128)}', space=vmem, size = 0x12000, scoped, tag = 'internal scratch']
  %s0 = inlined_call_operand.vmem [shape: bf16[8,25], index: 0, kind: input, shape index: {}]
  %s1 = inlined_call_operand.vmem [shape: bf16[25,128], index: 1, kind: input, shape index: {}]
  %s2 = inlined_call_operand.vmem [shape: f32[8,1], index: 2, kind: input, shape index: {}]
  %s3 = inlined_call_operand.vmem [shape: bf16[8,128], index: 3, kind: output, shape index: {}]
  %s4 = sld [smem:[#allocation0]]
  $region22: #{dcgan_discriminator_forward.3} parent=0
    _
  %s6 = ssub.s32 1, %s4
  %s7 = scalar_select 0, %s6, %s4
  // Predicated region
  $region2: #{dcgan_discriminator_forward.3} parent=0 // pred_check
    _
  $region3: #{dcgan_discriminator_forward.3} parent=0 // pred_check_branch
    %9 = sbr.rel (0) target = $region5
  $region4: #{dcgan_discriminator_forward.3} parent=0 // pred_region
    _
  $region5: #{dcgan_discriminator_forward.3} parent=0 // pred_fallthru
    _
  // Predicated region
  $region6: #{dcgan_discriminator_forward.3} parent=0 // pred_check
    _
  $region7: #{dcgan_discriminator_forward.3} parent=0 // pred_check_branch
    %11 = sbr.rel (0) target = $region9
  $region8: #{dcgan_discriminator_forward.3} parent=0 // pred_region
    _
  $region9: #{dcgan_discriminator_forward.3} parent=0 // pred_fallthru
    _
  // Predicated region
  $region10: #{dcgan_discriminator_forward.3} parent=0 // pred_check
    _
  $region11: #{dcgan_discriminator_forward.3} parent=0 // pred_check_branch
    %13 = sbr.rel (0) target = $region13
  $region12: #{dcgan_discriminator_forward.3} parent=0 // pred_region
    _
  $region13: #{dcgan_discriminator_forward.3} parent=0 // pred_fallthru
    _
  %v15 = vld [vmem:[%s0] sm:$0xf]
  %v16 = vld [vmem:[%s1] sm:$0xf]
  %v17 = vld [vmem:[%s1 + $0x4] sm:$0xf]
  %v18 = vld [vmem:[%s1 + $0x8] sm:$0xf]
  %v19 = vld [vmem:[%s1 + $0xc] sm:$0x1]
  %v20 = vld [vmem:[%s2] sm:$0xff]
  %22 = vset.pattern.permute.xlu0 0
  %23 = vperm.xlu0 %22, %v20
  %v24 = vpop.permute.xlu0 %23
  %v30 = vunpack.c.l.b16 %v16
  %v31 = vunpack.c.l.b16 %v17
  %v32 = vunpack.c.l.b16 %v18
  %v33 = vunpack.c.l.b16 %v19
  %v34 = vpack.c.b16 %v31, %v30
  %v35 = vpack.c.b16 %v33, %v32
  %vm37 = vcmask 203776
  %v39 = vsel %vm37, %v15, 0
  %vm41 = vcmask 1043456
  %vm42 = vcmask 1044480
  %v43 = vsel %vm41, 4294967295, 65535
  %v44 = vsel %vm42, %v43, 0
  %v46 = vand.u32 %v35, %v44
  %48 = vmatprep.subr.bf16.mxu0 0
  %49 = vmatpush1.bf16.msra.mxu0 %v34
  %50 = vmatprep.subr.bf16.mxu0 0
  %51 = vmatpush1.bf16.msra.mxu0 %v46
  %52 = vmatprep.subr.bf16.mxu0 0
  %53 = vmatpush1.bf16.msra.mxu0 0
  %54 = vmatprep.subr.bf16.mxu0 0
  %55 = vmatpush1.bf16.msra.mxu0 0
  %56 = vmatprep.subr.bf16.mxu0 0
  %57 = vmatpush1.bf16.msra.mxu0 0
  %58 = vmatprep.subr.bf16.mxu0 0
  %59 = vmatpush1.bf16.msra.mxu0 0
  %60 = vmatprep.subr.bf16.mxu0 0
  %61 = vmatpush1.bf16.msra.mxu0 0
  %62 = vmatprep.subr.bf16.mxu0 0
  %63 = vmatpush1.bf16.msra.mxu0 0
  %64 = vmatprep.subr.bf16.mxu0 0
  %65 = vmatpush1.bf16.msra.mxu0 0
  %66 = vmatprep.subr.bf16.mxu0 0
  %67 = vmatpush1.bf16.msra.mxu0 0
  %68 = vmatprep.subr.bf16.mxu0 0
  %69 = vmatpush1.bf16.msra.mxu0 0
  %70 = vmatprep.subr.bf16.mxu0 0
  %71 = vmatpush1.bf16.msra.mxu0 0
  %72 = vmatprep.subr.bf16.mxu0 0
  %73 = vmatpush1.bf16.msra.mxu0 0
  %74 = vmatprep.subr.bf16.mxu0 0
  %75 = vmatpush1.bf16.msra.mxu0 0
  %76 = vmatprep.subr.bf16.mxu0 0
  %77 = vmatpush1.bf16.msra.mxu0 0
  %78 = vmatprep.subr.bf16.mxu0 0
  %79 = vmatpush1.bf16.msra.mxu0 0
  %80 = vmatprep.mubr.bf16.mxu0 0
  %81 = vmatmul.mubr.bf16.gmra.mrb[0].mxu0 %v39
  %v82 = vpop.f32.mrb[0].mxu0
  %v83 = vadd.f32 %v24, %v82
  %v84 = vpop.f32.mrb[0].mxu0
  %v85 = vpop.f32.mrb[0].mxu0
  %v86 = vpop.f32.mrb[0].mxu0
  %87 = vdwg.mxu0
  %vm88 = vcmp.gt.f32.partialorder %v83, 0.0
  %v89 = vmul.f32 %v83, 0.2
  %v90 = vsel %vm88, %v83, %v89
  %v91 = vpack.c.bf16 %v90, %v90
  %92 = vst [vmem:[%s3] sm:$0xf] %v91
  // Predicated region
  $region14: #{dcgan_discriminator_forward.3} parent=0 // pred_check
    _
  $region15: #{dcgan_discriminator_forward.3} parent=0 // pred_check_branch
    %94 = sbr.rel (0) target = $region17
  $region16: #{dcgan_discriminator_forward.3} parent=0 // pred_region
    _
  $region17: #{dcgan_discriminator_forward.3} parent=0 // pred_fallthru
    _
  // Predicated region
  $region18: #{dcgan_discriminator_forward.3} parent=0 // pred_check
    _
  $region19: #{dcgan_discriminator_forward.3} parent=0 // pred_check_branch
    %96 = sbr.rel (0) target = $region21
  $region20: #{dcgan_discriminator_forward.3} parent=0 // pred_region
    _
  $region21: #{dcgan_discriminator_forward.3} parent=0 // pred_fallthru
    _

// kernel: dcgan_discriminator_forward.4
$region0: #{dcgan_discriminator_forward.4}
  #allocation0 [shape = 'u32[]', space=smem, size = 0x4, offset = 0x4, fixed_abs, tag = 'smem constant byte address 0x4 - core index']
  #allocation1 [shape = 'u32[144,128]{1,0:T(1,128)}', space=vmem, size = 0x12000, scoped, tag = 'internal scratch']
  %s0 = inlined_call_operand.vmem [shape: bf16[16,200], index: 0, kind: input, shape index: {}]
  %s1 = inlined_call_operand.vmem [shape: bf16[200,32], index: 1, kind: input, shape index: {}]
  %s2 = inlined_call_operand.vmem [shape: f32[16,1], index: 2, kind: input, shape index: {}]
  %s3 = inlined_call_operand.vmem [shape: f32[16,1], index: 3, kind: input, shape index: {}]
  %s4 = inlined_call_operand.vmem [shape: f32[16,1], index: 4, kind: input, shape index: {}]
  %s5 = inlined_call_operand.vmem [shape: bf16[16,32], index: 5, kind: output, shape index: {}]
  %s6 = sld [smem:[#allocation0]]
  $region30: #{dcgan_discriminator_forward.4} parent=0
    _
  %s8 = ssub.s32 1, %s6
  %s9 = scalar_select 0, %s8, %s6
  // Predicated region
  $region2: #{dcgan_discriminator_forward.4} parent=0 // pred_check
    _
  $region3: #{dcgan_discriminator_forward.4} parent=0 // pred_check_branch
    %11 = sbr.rel (0) target = $region5
  $region4: #{dcgan_discriminator_forward.4} parent=0 // pred_region
    _
  $region5: #{dcgan_discriminator_forward.4} parent=0 // pred_fallthru
    _
  // Predicated region
  $region6: #{dcgan_discriminator_forward.4} parent=0 // pred_check
    _
  $region7: #{dcgan_discriminator_forward.4} parent=0 // pred_check_branch
    %13 = sbr.rel (0) target = $region9
  $region8: #{dcgan_discriminator_forward.4} parent=0 // pred_region
    _
  $region9: #{dcgan_discriminator_forward.4} parent=0 // pred_fallthru
    _
  // Predicated region
  $region10: #{dcgan_discriminator_forward.4} parent=0 // pred_check
    _
  $region11: #{dcgan_discriminator_forward.4} parent=0 // pred_check_branch
    %15 = sbr.rel (0) target = $region13
  $region12: #{dcgan_discriminator_forward.4} parent=0 // pred_region
    _
  $region13: #{dcgan_discriminator_forward.4} parent=0 // pred_fallthru
    _
  // Predicated region
  $region14: #{dcgan_discriminator_forward.4} parent=0 // pred_check
    _
  $region15: #{dcgan_discriminator_forward.4} parent=0 // pred_check_branch
    %17 = sbr.rel (0) target = $region17
  $region16: #{dcgan_discriminator_forward.4} parent=0 // pred_region
    _
  $region17: #{dcgan_discriminator_forward.4} parent=0 // pred_fallthru
    _
  // Predicated region
  $region18: #{dcgan_discriminator_forward.4} parent=0 // pred_check
    _
  $region19: #{dcgan_discriminator_forward.4} parent=0 // pred_check_branch
    %19 = sbr.rel (0) target = $region21
  $region20: #{dcgan_discriminator_forward.4} parent=0 // pred_region
    _
  $region21: #{dcgan_discriminator_forward.4} parent=0 // pred_fallthru
    _
  %v21 = vld [vmem:[%s0] sm:$0xff]
  %v22 = vld [vmem:[%s0 + $0x8] sm:$0xff]
  %v23 = vld [vmem:[%s1] sm:$0xf]
  %v24 = vld [vmem:[%s1 + $0x4] sm:$0xf]
  %v25 = vld [vmem:[%s1 + $0x8] sm:$0xf]
  %v26 = vld [vmem:[%s1 + $0xc] sm:$0xf]
  %v27 = vld [vmem:[%s1 + $0x10] sm:$0xf]
  %v28 = vld [vmem:[%s1 + $0x14] sm:$0xf]
  %v29 = vld [vmem:[%s1 + $0x18] sm:$0xf]
  %v30 = vld [vmem:[%s1 + $0x1c] sm:$0xf]
  %v31 = vld [vmem:[%s1 + $0x20] sm:$0xf]
  %v32 = vld [vmem:[%s1 + $0x24] sm:$0xf]
  %v33 = vld [vmem:[%s1 + $0x28] sm:$0xf]
  %v34 = vld [vmem:[%s1 + $0x2c] sm:$0xf]
  %v35 = vld [vmem:[%s1 + $0x30] sm:$0xf]
  %v36 = vld [vmem:[%s1 + $0x34] sm:$0xf]
  %v37 = vld [vmem:[%s1 + $0x38] sm:$0xf]
  %v38 = vld [vmem:[%s1 + $0x3c] sm:$0xf]
  %v39 = vld [vmem:[%s1 + $0x40] sm:$0xf]
  %v40 = vld [vmem:[%s1 + $0x44] sm:$0xf]
  %v41 = vld [vmem:[%s1 + $0x48] sm:$0xf]
  %v42 = vld [vmem:[%s1 + $0x4c] sm:$0xf]
  %v43 = vld [vmem:[%s1 + $0x50] sm:$0xf]
  %v44 = vld [vmem:[%s1 + $0x54] sm:$0xf]
  %v45 = vld [vmem:[%s1 + $0x58] sm:$0xf]
  %v46 = vld [vmem:[%s1 + $0x5c] sm:$0xf]
  %v47 = vld [vmem:[%s1 + $0x60] sm:$0xf]
  %v48 = vld [vmem:[%s2] sm:$0xff]
  %v49 = vld [vmem:[%s2 + $0x8] sm:$0xff]
  %51 = vset.pattern.permute.xlu0 0
  %52 = vperm.xlu0 %51, %v48
  %v53 = vpop.permute.xlu0 %52
  %56 = vset.pattern.permute.xlu0 0
  %57 = vperm.xlu0 %56, %v49
  %v58 = vpop.permute.xlu0 %57
  %v62 = vunpack.c.l.b16 %v21
  %v63 = vunpack.c.h.b16 %v21
  %v64 = vunpack.c.l.b16 %v22
  %v65 = vunpack.c.h.b16 %v22
  %v66 = vpack.c.b16 %v64, %v62
  %v67 = vpack.c.b16 %v65, %v63
  %v94 = vunpack.c.l.b16 %v23
  %v95 = vunpack.c.l.b16 %v24
  %v96 = vunpack.c.l.b16 %v25
  %v97 = vunpack.c.l.b16 %v26
  %v98 = vunpack.c.l.b16 %v27
  %v99 = vunpack.c.l.b16 %v28
  %v100 = vunpack.c.l.b16 %v29
  %v101 = vunpack.c.l.b16 %v30
  %v102 = vunpack.c.l.b16 %v31
  %v103 = vunpack.c.l.b16 %v32
  %v104 = vunpack.c.l.b16 %v33
  %v105 = vunpack.c.l.b16 %v34
  %v106 = vunpack.c.l.b16 %v35
  %v107 = vunpack.c.l.b16 %v36
  %v108 = vunpack.c.l.b16 %v37
  %v109 = vunpack.c.l.b16 %v38
  %v110 = vunpack.c.l.b16 %v39
  %v111 = vunpack.c.l.b16 %v40
  %v112 = vunpack.c.l.b16 %v41
  %v113 = vunpack.c.l.b16 %v42
  %v114 = vunpack.c.l.b16 %v43
  %v115 = vunpack.c.l.b16 %v44
  %v116 = vunpack.c.l.b16 %v45
  %v117 = vunpack.c.l.b16 %v46
  %v118 = vunpack.c.l.b16 %v47
  %v119 = vpack.c.b16 %v95, %v94
  %v120 = vpack.c.b16 %v97, %v96
  %v121 = vpack.c.b16 %v99, %v98
  %v122 = vpack.c.b16 %v101, %v100
  %v123 = vpack.c.b16 %v103, %v102
  %v124 = vpack.c.b16 %v105, %v104
  %v125 = vpack.c.b16 %v107, %v106
  %v126 = vpack.c.b16 %v109, %v108
  %v127 = vpack.c.b16 %v111, %v110
  %v128 = vpack.c.b16 %v113, %v112
  %v129 = vpack.c.b16 %v115, %v114
  %v130 = vpack.c.b16 %v117, %v116
  %v131 = vpack.c.b16 %v118, %v118
  %vm144 = vcmask 588800
  %v146 = vsel %vm144, %v67, 0
  %vm148 = vcmask 1043456
  %v150 = vsel %vm148, %v131, 0
  %152 = vmatprep.subr.bf16.mxu0 0
  %153 = vmatpush1.bf16.msra.mxu0 %v119
  %154 = vmatprep.subr.bf16.mxu0 0
  %155 = vmatpush1.bf16.msra.mxu0 %v120
  %156 = vmatprep.subr.bf16.mxu0 0
  %157 = vmatpush1.bf16.msra.mxu0 %v121
  %158 = vmatprep.subr.bf16.mxu0 0
  %159 = vmatpush1.bf16.msra.mxu0 %v122
  %160 = vmatprep.subr.bf16.mxu0 0
  %161 = vmatpush1.bf16.msra.mxu0 %v123
  %162 = vmatprep.subr.bf16.mxu0 0
  %163 = vmatpush1.bf16.msra.mxu0 %v124
  %164 = vmatprep.subr.bf16.mxu0 0
  %165 = vmatpush1.bf16.msra.mxu0 %v125
  %166 = vmatprep.subr.bf16.mxu0 0
  %167 = vmatpush1.bf16.msra.mxu0 %v126
  %168 = vmatprep.subr.bf16.mxu0 0
  %169 = vmatpush1.bf16.msra.mxu0 %v127
  %170 = vmatprep.subr.bf16.mxu0 0
  %171 = vmatpush1.bf16.msra.mxu0 %v128
  %172 = vmatprep.subr.bf16.mxu0 0
  %173 = vmatpush1.bf16.msra.mxu0 %v129
  %174 = vmatprep.subr.bf16.mxu0 0
  %175 = vmatpush1.bf16.msra.mxu0 %v130
  %176 = vmatprep.subr.bf16.mxu0 0
  %177 = vmatpush1.bf16.msra.mxu0 %v150
  %178 = vmatprep.subr.bf16.mxu0 0
  %179 = vmatpush1.bf16.msra.mxu0 0
  %180 = vmatprep.subr.bf16.mxu0 0
  %181 = vmatpush1.bf16.msra.mxu0 0
  %182 = vmatprep.subr.bf16.mxu0 0
  %183 = vmatpush1.bf16.msra.mxu0 0
  %184 = vmatprep.mubr.bf16.mxu0 %v146
  %185 = vmatmul.mubr.bf16.gmra.mrb[0].mxu0 %v66
  %v186 = vpop.f32.mrb[0].mxu0
  %v187 = vadd.f32 %v53, %v186
  %v188 = vpop.f32.mrb[0].mxu0
  %v189 = vpop.f32.mrb[0].mxu0
  %v190 = vadd.f32 %v58, %v189
  %v191 = vpop.f32.mrb[0].mxu0
  %192 = vdwg.mxu0
  %vm193 = vcmask 261120
  %v194 = vsel %vm193, %v187, 0.0
  %195 = vadd.xlane.f32.xlu0 %v194
  %v196 = vpop.xlane.xlu0 %195
  %v197 = vsel %vm193, %v190, 0.0
  %198 = vadd.xlane.f32.xlu0 %v197
  %v199 = vpop.xlane.xlu0 %198
  %v200 = vrcp.pop 32.0
  %v201 = vmul.f32 %v196, %v200
  %v202 = vmul.f32 %v199, %v200
  %v203 = vsub.f32 %v187, %v201
  %v204 = vsub.f32 %v190, %v202
  %v205 = vmul.f32 %v203, %v203
  %v206 = vmul.f32 %v204, %v204
  %v207 = vsel %vm193, %v205, 0.0
  %208 = vadd.xlane.f32.xlu0 %v207
  %v209 = vpop.xlane.xlu0 %208
  %v210 = vsel %vm193, %v206, 0.0
  %211 = vadd.xlane.f32.xlu0 %v210
  %v212 = vpop.xlane.xlu0 %211
  %v213 = vmul.f32 %v209, %v200
  %v214 = vmul.f32 %v212, %v200
  %v215 = vadd.f32 %v213, 1e-05
  %v216 = vadd.f32 %v214, 1e-05
  %v217 = vrsqrt.pop %v215
  %v218 = vrsqrt.pop %v216
  %v219 = vld [vmem:[%s3] sm:$0xff]
  %v220 = vld [vmem:[%s3 + $0x8] sm:$0xff]
  %v221 = vmul.f32 %v219, %v217
  %v222 = vmul.f32 %v220, %v218
  %v223 = vld [vmem:[%s4] sm:$0xff]
  %v224 = vld [vmem:[%s4 + $0x8] sm:$0xff]
  %v225 = vmul.f32 %v201, %v221
  %v226 = vmul.f32 %v202, %v222
  %v227 = vsub.f32 %v223, %v225
  %v228 = vsub.f32 %v224, %v226
  %230 = vset.pattern.permute.xlu0 0
  %231 = vperm.xlu0 %230, %v221
  %v232 = vpop.permute.xlu0 %231
  %235 = vset.pattern.permute.xlu0 0
  %236 = vperm.xlu0 %235, %v222
  %v237 = vpop.permute.xlu0 %236
  %v239 = vmul.f32 %v187, %v232
  %v240 = vmul.f32 %v190, %v237
  %242 = vset.pattern.permute.xlu0 0
  %243 = vperm.xlu0 %242, %v227
  %v244 = vpop.permute.xlu0 %243
  %247 = vset.pattern.permute.xlu0 0
  %248 = vperm.xlu0 %247, %v228
  %v249 = vpop.permute.xlu0 %248
  %v251 = vadd.f32 %v239, %v244
  %v252 = vadd.f32 %v240, %v249
  %vm253 = vcmp.gt.f32.partialorder %v251, 0.0
  %vm254 = vcmp.gt.f32.partialorder %v252, 0.0
  %v255 = vmul.f32 %v251, 0.2
  %v256 = vmul.f32 %v252, 0.2
  %v257 = vsel %vm253, %v251, %v255
  %v258 = vsel %vm254, %v252, %v256
  %v259 = vpack.c.bf16 %v258, %v257
  %v261 = vunpack.c.l.b16 %v259
  %v262 = vunpack.c.h.b16 %v259
  %v263 = vpack.c.b16 %v261, %v261
  %v264 = vpack.c.b16 %v262, %v262
  %vm267 = vcmask 257024
  %268 = vst.msk [vmem:[%s5] sm:$0xf] %vm267, %v263
  %269 = vst.msk [vmem:[%s5 + $0x4] sm:$0xf] %vm267, %v264
  // Predicated region
  $region22: #{dcgan_discriminator_forward.4} parent=0 // pred_check
    _
  $region23: #{dcgan_discriminator_forward.4} parent=0 // pred_check_branch
    %271 = sbr.rel (0) target = $region25
  $region24: #{dcgan_discriminator_forward.4} parent=0 // pred_region
    _
  $region25: #{dcgan_discriminator_forward.4} parent=0 // pred_fallthru
    _
  // Predicated region
  $region26: #{dcgan_discriminator_forward.4} parent=0 // pred_check
    _
  $region27: #{dcgan_discriminator_forward.4} parent=0 // pred_check_branch
    %273 = sbr.rel (0) target = $region29
  $region28: #{dcgan_discriminator_forward.4} parent=0 // pred_region
    _
  $region29: #{dcgan_discriminator_forward.4} parent=0 // pred_fallthru
    _

// kernel: dcgan_discriminator_forward.5
$region0: #{dcgan_discriminator_forward.5}
  #allocation0 [shape = 'u32[]', space=smem, size = 0x4, offset = 0x4, fixed_abs, tag = 'smem constant byte address 0x4 - core index']
  #allocation1 [shape = 'u32[144,128]{1,0:T(1,128)}', space=vmem, size = 0x12000, scoped, tag = 'internal scratch']
  %s0 = inlined_call_operand.vmem [shape: bf16[32,400], index: 0, kind: input, shape index: {}]
  %s1 = inlined_call_operand.vmem [shape: bf16[400,8], index: 1, kind: input, shape index: {}]
  %s2 = inlined_call_operand.vmem [shape: f32[32,1], index: 2, kind: input, shape index: {}]
  %s3 = inlined_call_operand.vmem [shape: f32[32,1], index: 3, kind: input, shape index: {}]
  %s4 = inlined_call_operand.vmem [shape: f32[32,1], index: 4, kind: input, shape index: {}]
  %s5 = inlined_call_operand.vmem [shape: f32[8,2], index: 5, kind: input, shape index: {}]
  %s6 = inlined_call_operand.vmem [shape: f32[32,2], index: 6, kind: output, shape index: {}]
  %s7 = sld [smem:[#allocation0]]
  $region34: #{dcgan_discriminator_forward.5} parent=0
    _
  %s9 = ssub.s32 1, %s7
  %s10 = scalar_select 0, %s9, %s7
  // Predicated region
  $region2: #{dcgan_discriminator_forward.5} parent=0 // pred_check
    _
  $region3: #{dcgan_discriminator_forward.5} parent=0 // pred_check_branch
    %12 = sbr.rel (0) target = $region5
  $region4: #{dcgan_discriminator_forward.5} parent=0 // pred_region
    _
  $region5: #{dcgan_discriminator_forward.5} parent=0 // pred_fallthru
    _
  // Predicated region
  $region6: #{dcgan_discriminator_forward.5} parent=0 // pred_check
    _
  $region7: #{dcgan_discriminator_forward.5} parent=0 // pred_check_branch
    %14 = sbr.rel (0) target = $region9
  $region8: #{dcgan_discriminator_forward.5} parent=0 // pred_region
    _
  $region9: #{dcgan_discriminator_forward.5} parent=0 // pred_fallthru
    _
  // Predicated region
  $region10: #{dcgan_discriminator_forward.5} parent=0 // pred_check
    _
  $region11: #{dcgan_discriminator_forward.5} parent=0 // pred_check_branch
    %16 = sbr.rel (0) target = $region13
  $region12: #{dcgan_discriminator_forward.5} parent=0 // pred_region
    _
  $region13: #{dcgan_discriminator_forward.5} parent=0 // pred_fallthru
    _
  // Predicated region
  $region14: #{dcgan_discriminator_forward.5} parent=0 // pred_check
    _
  $region15: #{dcgan_discriminator_forward.5} parent=0 // pred_check_branch
    %18 = sbr.rel (0) target = $region17
  $region16: #{dcgan_discriminator_forward.5} parent=0 // pred_region
    _
  $region17: #{dcgan_discriminator_forward.5} parent=0 // pred_fallthru
    _
  // Predicated region
  $region18: #{dcgan_discriminator_forward.5} parent=0 // pred_check
    _
  $region19: #{dcgan_discriminator_forward.5} parent=0 // pred_check_branch
    %20 = sbr.rel (0) target = $region21
  $region20: #{dcgan_discriminator_forward.5} parent=0 // pred_region
    _
  $region21: #{dcgan_discriminator_forward.5} parent=0 // pred_fallthru
    _
  // Predicated region
  $region22: #{dcgan_discriminator_forward.5} parent=0 // pred_check
    _
  $region23: #{dcgan_discriminator_forward.5} parent=0 // pred_check_branch
    %22 = sbr.rel (0) target = $region25
  $region24: #{dcgan_discriminator_forward.5} parent=0 // pred_region
    _
  $region25: #{dcgan_discriminator_forward.5} parent=0 // pred_fallthru
    _
  %v24 = vld [vmem:[%s0] sm:$0xff]
  %v25 = vld [vmem:[%s0 + $0x8] sm:$0xff]
  %v26 = vld [vmem:[%s0 + $0x10] sm:$0xff]
  %v27 = vld [vmem:[%s0 + $0x18] sm:$0xff]
  %v28 = vld [vmem:[%s0 + $0x20] sm:$0xff]
  %v29 = vld [vmem:[%s0 + $0x28] sm:$0xff]
  %v30 = vld [vmem:[%s0 + $0x30] sm:$0xff]
  %v31 = vld [vmem:[%s0 + $0x38] sm:$0xff]
  %v32 = vld [vmem:[%s1] sm:$0xf]
  %v33 = vld [vmem:[%s1 + $0x4] sm:$0xf]
  %v34 = vld [vmem:[%s1 + $0x8] sm:$0xf]
  %v35 = vld [vmem:[%s1 + $0xc] sm:$0xf]
  %v36 = vld [vmem:[%s1 + $0x10] sm:$0xf]
  %v37 = vld [vmem:[%s1 + $0x14] sm:$0xf]
  %v38 = vld [vmem:[%s1 + $0x18] sm:$0xf]
  %v39 = vld [vmem:[%s1 + $0x1c] sm:$0xf]
  %v40 = vld [vmem:[%s1 + $0x20] sm:$0xf]
  %v41 = vld [vmem:[%s1 + $0x24] sm:$0xf]
  %v42 = vld [vmem:[%s1 + $0x28] sm:$0xf]
  %v43 = vld [vmem:[%s1 + $0x2c] sm:$0xf]
  %v44 = vld [vmem:[%s1 + $0x30] sm:$0xf]
  %v45 = vld [vmem:[%s1 + $0x34] sm:$0xf]
  %v46 = vld [vmem:[%s1 + $0x38] sm:$0xf]
  %v47 = vld [vmem:[%s1 + $0x3c] sm:$0xf]
  %v48 = vld [vmem:[%s1 + $0x40] sm:$0xf]
  %v49 = vld [vmem:[%s1 + $0x44] sm:$0xf]
  %v50 = vld [vmem:[%s1 + $0x48] sm:$0xf]
  %v51 = vld [vmem:[%s1 + $0x4c] sm:$0xf]
  %v52 = vld [vmem:[%s1 + $0x50] sm:$0xf]
  %v53 = vld [vmem:[%s1 + $0x54] sm:$0xf]
  %v54 = vld [vmem:[%s1 + $0x58] sm:$0xf]
  %v55 = vld [vmem:[%s1 + $0x5c] sm:$0xf]
  %v56 = vld [vmem:[%s1 + $0x60] sm:$0xf]
  %v57 = vld [vmem:[%s1 + $0x64] sm:$0xf]
  %v58 = vld [vmem:[%s1 + $0x68] sm:$0xf]
  %v59 = vld [vmem:[%s1 + $0x6c] sm:$0xf]
  %v60 = vld [vmem:[%s1 + $0x70] sm:$0xf]
  %v61 = vld [vmem:[%s1 + $0x74] sm:$0xf]
  %v62 = vld [vmem:[%s1 + $0x78] sm:$0xf]
  %v63 = vld [vmem:[%s1 + $0x7c] sm:$0xf]
  %v64 = vld [vmem:[%s1 + $0x80] sm:$0xf]
  %v65 = vld [vmem:[%s1 + $0x84] sm:$0xf]
  %v66 = vld [vmem:[%s1 + $0x88] sm:$0xf]
  %v67 = vld [vmem:[%s1 + $0x8c] sm:$0xf]
  %v68 = vld [vmem:[%s1 + $0x90] sm:$0xf]
  %v69 = vld [vmem:[%s1 + $0x94] sm:$0xf]
  %v70 = vld [vmem:[%s1 + $0x98] sm:$0xf]
  %v71 = vld [vmem:[%s1 + $0x9c] sm:$0xf]
  %v72 = vld [vmem:[%s1 + $0xa0] sm:$0xf]
  %v73 = vld [vmem:[%s1 + $0xa4] sm:$0xf]
  %v74 = vld [vmem:[%s1 + $0xa8] sm:$0xf]
  %v75 = vld [vmem:[%s1 + $0xac] sm:$0xf]
  %v76 = vld [vmem:[%s1 + $0xb0] sm:$0xf]
  %v77 = vld [vmem:[%s1 + $0xb4] sm:$0xf]
  %v78 = vld [vmem:[%s1 + $0xb8] sm:$0xf]
  %v79 = vld [vmem:[%s1 + $0xbc] sm:$0xf]
  %v80 = vld [vmem:[%s1 + $0xc0] sm:$0xf]
  %v81 = vld [vmem:[%s1 + $0xc4] sm:$0xf]
  %v82 = vld [vmem:[%s2] sm:$0xff]
  %v83 = vld [vmem:[%s2 + $0x8] sm:$0xff]
  %v84 = vld [vmem:[%s2 + $0x10] sm:$0xff]
  %v85 = vld [vmem:[%s2 + $0x18] sm:$0xff]
  %87 = vset.pattern.permute.xlu0 0
  %88 = vperm.xlu0 %87, %v82
  %v89 = vpop.permute.xlu0 %88
  %92 = vset.pattern.permute.xlu0 0
  %93 = vperm.xlu0 %92, %v83
  %v94 = vpop.permute.xlu0 %93
  %97 = vset.pattern.permute.xlu0 0
  %98 = vperm.xlu0 %97, %v84
  %v99 = vpop.permute.xlu0 %98
  %102 = vset.pattern.permute.xlu0 0
  %103 = vperm.xlu0 %102, %v85
  %v104 = vpop.permute.xlu0 %103
  %v114 = vunpack.c.l.b16 %v24
  %v115 = vunpack.c.h.b16 %v24
  %v116 = vunpack.c.l.b16 %v25
  %v117 = vunpack.c.h.b16 %v25
  %v118 = vunpack.c.l.b16 %v26
  %v119 = vunpack.c.h.b16 %v26
  %v120 = vunpack.c.l.b16 %v27
  %v121 = vunpack.c.h.b16 %v27
  %v122 = vunpack.c.l.b16 %v28
  %v123 = vunpack.c.h.b16 %v28
  %v124 = vunpack.c.l.b16 %v29
  %v125 = vunpack.c.h.b16 %v29
  %v126 = vunpack.c.l.b16 %v30
  %v127 = vunpack.c.h.b16 %v30
  %v128 = vunpack.c.l.b16 %v31
  %v129 = vunpack.c.h.b16 %v31
  %v130 = vpack.c.b16 %v118, %v114
  %v131 = vpack.c.b16 %v119, %v115
  %v132 = vpack.c.b16 %v120, %v116
  %v133 = vpack.c.b16 %v121, %v117
  %v134 = vpack.c.b16 %v126, %v122
  %v135 = vpack.c.b16 %v127, %v123
  %v136 = vpack.c.b16 %v128, %v124
  %v137 = vpack.c.b16 %v129, %v125
  %v194 = vunpack.c.l.b16 %v32
  %v195 = vunpack.c.l.b16 %v33
  %v196 = vunpack.c.l.b16 %v34
  %v197 = vunpack.c.l.b16 %v35
  %v198 = vunpack.c.l.b16 %v36
  %v199 = vunpack.c.l.b16 %v37
  %v200 = vunpack.c.l.b16 %v38
  %v201 = vunpack.c.l.b16 %v39
  %v202 = vunpack.c.l.b16 %v40
  %v203 = vunpack.c.l.b16 %v41
  %v204 = vunpack.c.l.b16 %v42
  %v205 = vunpack.c.l.b16 %v43
  %v206 = vunpack.c.l.b16 %v44
  %v207 = vunpack.c.l.b16 %v45
  %v208 = vunpack.c.l.b16 %v46
  %v209 = vunpack.c.l.b16 %v47
  %v210 = vunpack.c.l.b16 %v48
  %v211 = vunpack.c.l.b16 %v49
  %v212 = vunpack.c.l.b16 %v50
  %v213 = vunpack.c.l.b16 %v51
  %v214 = vunpack.c.l.b16 %v52
  %v215 = vunpack.c.l.b16 %v53
  %v216 = vunpack.c.l.b16 %v54
  %v217 = vunpack.c.l.b16 %v55
  %v218 = vunpack.c.l.b16 %v56
  %v219 = vunpack.c.l.b16 %v57
  %v220 = vunpack.c.l.b16 %v58
  %v221 = vunpack.c.l.b16 %v59
  %v222 = vunpack.c.l.b16 %v60
  %v223 = vunpack.c.l.b16 %v61
  %v224 = vunpack.c.l.b16 %v62
  %v225 = vunpack.c.l.b16 %v63
  %v226 = vunpack.c.l.b16 %v64
  %v227 = vunpack.c.l.b16 %v65
  %v228 = vunpack.c.l.b16 %v66
  %v229 = vunpack.c.l.b16 %v67
  %v230 = vunpack.c.l.b16 %v68
  %v231 = vunpack.c.l.b16 %v69
  %v232 = vunpack.c.l.b16 %v70
  %v233 = vunpack.c.l.b16 %v71
  %v234 = vunpack.c.l.b16 %v72
  %v235 = vunpack.c.l.b16 %v73
  %v236 = vunpack.c.l.b16 %v74
  %v237 = vunpack.c.l.b16 %v75
  %v238 = vunpack.c.l.b16 %v76
  %v239 = vunpack.c.l.b16 %v77
  %v240 = vunpack.c.l.b16 %v78
  %v241 = vunpack.c.l.b16 %v79
  %v242 = vunpack.c.l.b16 %v80
  %v243 = vunpack.c.l.b16 %v81
  %v244 = vpack.c.b16 %v195, %v194
  %v245 = vpack.c.b16 %v197, %v196
  %v246 = vpack.c.b16 %v199, %v198
  %v247 = vpack.c.b16 %v201, %v200
  %v248 = vpack.c.b16 %v203, %v202
  %v249 = vpack.c.b16 %v205, %v204
  %v250 = vpack.c.b16 %v207, %v206
  %v251 = vpack.c.b16 %v209, %v208
  %v252 = vpack.c.b16 %v211, %v210
  %v253 = vpack.c.b16 %v213, %v212
  %v254 = vpack.c.b16 %v215, %v214
  %v255 = vpack.c.b16 %v217, %v216
  %v256 = vpack.c.b16 %v219, %v218
  %v257 = vpack.c.b16 %v221, %v220
  %v258 = vpack.c.b16 %v223, %v222
  %v259 = vpack.c.b16 %v225, %v224
  %v260 = vpack.c.b16 %v227, %v226
  %v261 = vpack.c.b16 %v229, %v228
  %v262 = vpack.c.b16 %v231, %v230
  %v263 = vpack.c.b16 %v233, %v232
  %v264 = vpack.c.b16 %v235, %v234
  %v265 = vpack.c.b16 %v237, %v236
  %v266 = vpack.c.b16 %v239, %v238
  %v267 = vpack.c.b16 %v241, %v240
  %v268 = vpack.c.b16 %v243, %v242
  %vm294 = vcmask 130048
  %v296 = vsel %vm294, %v133, 0
  %v299 = vsel %vm294, %v137, 0
  %301 = vmatprep.subr.bf16.mxu0 0
  %302 = vmatpush1.bf16.msra.mxu0 %v244
  %303 = vmatprep.subr.bf16.mxu0 0
  %304 = vmatpush1.bf16.msra.mxu0 %v245
  %305 = vmatprep.subr.bf16.mxu0 0
  %306 = vmatpush1.bf16.msra.mxu0 %v246
  %307 = vmatprep.subr.bf16.mxu0 0
  %308 = vmatpush1.bf16.msra.mxu0 %v247
  %309 = vmatprep.subr.bf16.mxu0 0
  %310 = vmatpush1.bf16.msra.mxu0 %v248
  %311 = vmatprep.subr.bf16.mxu0 0
  %312 = vmatpush1.bf16.msra.mxu0 %v249
  %313 = vmatprep.subr.bf16.mxu0 0
  %314 = vmatpush1.bf16.msra.mxu0 %v250
  %315 = vmatprep.subr.bf16.mxu0 0
  %316 = vmatpush1.bf16.msra.mxu0 %v251
  %317 = vmatprep.subr.bf16.mxu0 0
  %318 = vmatpush1.bf16.msra.mxu0 %v252
  %319 = vmatprep.subr.bf16.mxu0 0
  %320 = vmatpush1.bf16.msra.mxu0 %v253
  %321 = vmatprep.subr.bf16.mxu0 0
  %322 = vmatpush1.bf16.msra.mxu0 %v254
  %323 = vmatprep.subr.bf16.mxu0 0
  %324 = vmatpush1.bf16.msra.mxu0 %v255
  %325 = vmatprep.subr.bf16.mxu0 0
  %326 = vmatpush1.bf16.msra.mxu0 %v256
  %327 = vmatprep.subr.bf16.mxu0 0
  %328 = vmatpush1.bf16.msra.mxu0 %v257
  %329 = vmatprep.subr.bf16.mxu0 0
  %330 = vmatpush1.bf16.msra.mxu0 %v258
  %331 = vmatprep.subr.bf16.mxu0 0
  %332 = vmatpush1.bf16.msra.mxu0 %v259
  %333 = vmatprep.mubr.bf16.mxu0 %v131
  %334 = vmatmul.mubr.bf16.gmra.mrb[0].mxu0 %v130
  %v335 = vpop.f32.mrb[0].mxu0
  %v336 = vadd.f32 %v89, %v335
  %v337 = vpop.f32.mrb[0].mxu0
  %v338 = vpop.f32.mrb[0].mxu0
  %v339 = vadd.f32 %v94, %v338
  %v340 = vpop.f32.mrb[0].mxu0
  %341 = vmatprep.mubr.bf16.mxu0 %v135
  %342 = vmatmul.mubr.bf16.gmra.mrb[0].mxu0 %v134
  %v343 = vpop.f32.mrb[0].mxu0
  %v344 = vadd.f32 %v99, %v343
  %v345 = vpop.f32.mrb[0].mxu0
  %v346 = vpop.f32.mrb[0].mxu0
  %v347 = vadd.f32 %v104, %v346
  %v348 = vpop.f32.mrb[0].mxu0
  %349 = vdwg.mxu0
  %350 = vmatprep.subr.bf16.mxu0 0
  %351 = vmatpush1.bf16.msra.mxu0 %v260
  %352 = vmatprep.subr.bf16.mxu0 0
  %353 = vmatpush1.bf16.msra.mxu0 %v261
  %354 = vmatprep.subr.bf16.mxu0 0
  %355 = vmatpush1.bf16.msra.mxu0 %v262
  %356 = vmatprep.subr.bf16.mxu0 0
  %357 = vmatpush1.bf16.msra.mxu0 %v263
  %358 = vmatprep.subr.bf16.mxu0 0
  %359 = vmatpush1.bf16.msra.mxu0 %v264
  %360 = vmatprep.subr.bf16.mxu0 0
  %361 = vmatpush1.bf16.msra.mxu0 %v265
  %362 = vmatprep.subr.bf16.mxu0 0
  %363 = vmatpush1.bf16.msra.mxu0 %v266
  %364 = vmatprep.subr.bf16.mxu0 0
  %365 = vmatpush1.bf16.msra.mxu0 %v267
  %366 = vmatprep.subr.bf16.mxu0 0
  %367 = vmatpush1.bf16.msra.mxu0 %v268
  %368 = vmatprep.subr.bf16.mxu0 0
  %369 = vmatpush1.bf16.msra.mxu0 0
  %370 = vmatprep.subr.bf16.mxu0 0
  %371 = vmatpush1.bf16.msra.mxu0 0
  %372 = vmatprep.subr.bf16.mxu0 0
  %373 = vmatpush1.bf16.msra.mxu0 0
  %374 = vmatprep.subr.bf16.mxu0 0
  %375 = vmatpush1.bf16.msra.mxu0 0
  %376 = vmatprep.subr.bf16.mxu0 0
  %377 = vmatpush1.bf16.msra.mxu0 0
  %378 = vmatprep.subr.bf16.mxu0 0
  %379 = vmatpush1.bf16.msra.mxu0 0
  %380 = vmatprep.subr.bf16.mxu0 0
  %381 = vmatpush1.bf16.msra.mxu0 0
  %382 = vmatprep.mubr.bf16.mxu0 %v296
  %383 = vmatmul.mubr.bf16.gmra.mrb[0].mxu0 %v132
  %v384 = vpop.f32.mrb[0].mxu0
  %v385 = vadd.f32 %v336, %v384
  %v386 = vpop.f32.mrb[0].mxu0
  %v387 = vpop.f32.mrb[0].mxu0
  %v388 = vadd.f32 %v339, %v387
  %v389 = vpop.f32.mrb[0].mxu0
  %390 = vmatprep.mubr.bf16.mxu0 %v299
  %391 = vmatmul.mubr.bf16.gmra.mrb[0].mxu0 %v136
  %v392 = vpop.f32.mrb[0].mxu0
  %v393 = vadd.f32 %v344, %v392
  %v394 = vpop.f32.mrb[0].mxu0
  %v395 = vpop.f32.mrb[0].mxu0
  %v396 = vadd.f32 %v347, %v395
  %v397 = vpop.f32.mrb[0].mxu0
  %398 = vdwg.mxu0
  %vm399 = vcmask 64512
  %v400 = vsel %vm399, %v385, 0.0
  %401 = vadd.xlane.f32.xlu0 %v400
  %v402 = vpop.xlane.xlu0 %401
  %v403 = vsel %vm399, %v388, 0.0
  %404 = vadd.xlane.f32.xlu0 %v403
  %v405 = vpop.xlane.xlu0 %404
  %v406 = vsel %vm399, %v393, 0.0
  %407 = vadd.xlane.f32.xlu0 %v406
  %v408 = vpop.xlane.xlu0 %407
  %v409 = vsel %vm399, %v396, 0.0
  %410 = vadd.xlane.f32.xlu0 %v409
  %v411 = vpop.xlane.xlu0 %410
  %v412 = vrcp.pop 8.0
  %v413 = vmul.f32 %v402, %v412
  %v414 = vmul.f32 %v405, %v412
  %v415 = vmul.f32 %v408, %v412
  %v416 = vmul.f32 %v411, %v412
  %v417 = vsub.f32 %v385, %v413
  %v418 = vsub.f32 %v388, %v414
  %v419 = vsub.f32 %v393, %v415
  %v420 = vsub.f32 %v396, %v416
  %v421 = vmul.f32 %v417, %v417
  %v422 = vmul.f32 %v418, %v418
  %v423 = vmul.f32 %v419, %v419
  %v424 = vmul.f32 %v420, %v420
  %v425 = vsel %vm399, %v421, 0.0
  %426 = vadd.xlane.f32.xlu0 %v425
  %v427 = vpop.xlane.xlu0 %426
  %v428 = vsel %vm399, %v422, 0.0
  %429 = vadd.xlane.f32.xlu0 %v428
  %v430 = vpop.xlane.xlu0 %429
  %v431 = vsel %vm399, %v423, 0.0
  %432 = vadd.xlane.f32.xlu0 %v431
  %v433 = vpop.xlane.xlu0 %432
  %v434 = vsel %vm399, %v424, 0.0
  %435 = vadd.xlane.f32.xlu0 %v434
  %v436 = vpop.xlane.xlu0 %435
  %v437 = vmul.f32 %v427, %v412
  %v438 = vmul.f32 %v430, %v412
  %v439 = vmul.f32 %v433, %v412
  %v440 = vmul.f32 %v436, %v412
  %v441 = vadd.f32 %v437, 1e-05
  %v442 = vadd.f32 %v438, 1e-05
  %v443 = vadd.f32 %v439, 1e-05
  %v444 = vadd.f32 %v440, 1e-05
  %v445 = vrsqrt.pop %v441
  %v446 = vrsqrt.pop %v442
  %v447 = vrsqrt.pop %v443
  %v448 = vrsqrt.pop %v444
  %v449 = vld [vmem:[%s3] sm:$0xff]
  %v450 = vld [vmem:[%s3 + $0x8] sm:$0xff]
  %v451 = vld [vmem:[%s3 + $0x10] sm:$0xff]
  %v452 = vld [vmem:[%s3 + $0x18] sm:$0xff]
  %v453 = vmul.f32 %v449, %v445
  %v454 = vmul.f32 %v450, %v446
  %v455 = vmul.f32 %v451, %v447
  %v456 = vmul.f32 %v452, %v448
  %v457 = vld [vmem:[%s4] sm:$0xff]
  %v458 = vld [vmem:[%s4 + $0x8] sm:$0xff]
  %v459 = vld [vmem:[%s4 + $0x10] sm:$0xff]
  %v460 = vld [vmem:[%s4 + $0x18] sm:$0xff]
  %v461 = vmul.f32 %v413, %v453
  %v462 = vmul.f32 %v414, %v454
  %v463 = vmul.f32 %v415, %v455
  %v464 = vmul.f32 %v416, %v456
  %v465 = vsub.f32 %v457, %v461
  %v466 = vsub.f32 %v458, %v462
  %v467 = vsub.f32 %v459, %v463
  %v468 = vsub.f32 %v460, %v464
  %470 = vset.pattern.permute.xlu0 0
  %471 = vperm.xlu0 %470, %v453
  %v472 = vpop.permute.xlu0 %471
  %475 = vset.pattern.permute.xlu0 0
  %476 = vperm.xlu0 %475, %v454
  %v477 = vpop.permute.xlu0 %476
  %480 = vset.pattern.permute.xlu0 0
  %481 = vperm.xlu0 %480, %v455
  %v482 = vpop.permute.xlu0 %481
  %485 = vset.pattern.permute.xlu0 0
  %486 = vperm.xlu0 %485, %v456
  %v487 = vpop.permute.xlu0 %486
  %v489 = vmul.f32 %v385, %v472
  %v490 = vmul.f32 %v388, %v477
  %v491 = vmul.f32 %v393, %v482
  %v492 = vmul.f32 %v396, %v487
  %494 = vset.pattern.permute.xlu0 0
  %495 = vperm.xlu0 %494, %v465
  %v496 = vpop.permute.xlu0 %495
  %499 = vset.pattern.permute.xlu0 0
  %500 = vperm.xlu0 %499, %v466
  %v501 = vpop.permute.xlu0 %500
  %504 = vset.pattern.permute.xlu0 0
  %505 = vperm.xlu0 %504, %v467
  %v506 = vpop.permute.xlu0 %505
  %509 = vset.pattern.permute.xlu0 0
  %510 = vperm.xlu0 %509, %v468
  %v511 = vpop.permute.xlu0 %510
  %v513 = vadd.f32 %v489, %v496
  %v514 = vadd.f32 %v490, %v501
  %v515 = vadd.f32 %v491, %v506
  %v516 = vadd.f32 %v492, %v511
  %vm517 = vcmp.gt.f32.partialorder %v513, 0.0
  %vm518 = vcmp.gt.f32.partialorder %v514, 0.0
  %vm519 = vcmp.gt.f32.partialorder %v515, 0.0
  %vm520 = vcmp.gt.f32.partialorder %v516, 0.0
  %v521 = vmul.f32 %v513, 0.2
  %v522 = vmul.f32 %v514, 0.2
  %v523 = vmul.f32 %v515, 0.2
  %v524 = vmul.f32 %v516, 0.2
  %v525 = vsel %vm517, %v513, %v521
  %v526 = vsel %vm518, %v514, %v522
  %v527 = vsel %vm519, %v515, %v523
  %v528 = vsel %vm520, %v516, %v524
  %v529 = vsub.f32 0.0, %v525
  %v530 = vsub.f32 0.0, %v526
  %v531 = vsub.f32 0.0, %v527
  %v532 = vsub.f32 0.0, %v528
  %v533 = vmul.f32 %v529, 1.442695
  %v534 = vpow.pop %v533
  %v535 = vmul.f32 %v530, 1.442695
  %v536 = vpow.pop %v535
  %v537 = vmul.f32 %v531, 1.442695
  %v538 = vpow.pop %v537
  %v539 = vmul.f32 %v532, 1.442695
  %v540 = vpow.pop %v539
  %v541 = vadd.f32 %v534, 1.0
  %v542 = vadd.f32 %v536, 1.0
  %v543 = vadd.f32 %v538, 1.0
  %v544 = vadd.f32 %v540, 1.0
  %v545 = vrcp.pop %v541
  %v546 = vmul.f32 1.0, %v545
  %v547 = vrcp.pop %v542
  %v548 = vmul.f32 1.0, %v547
  %v549 = vrcp.pop %v543
  %v550 = vmul.f32 1.0, %v549
  %v551 = vrcp.pop %v544
  %v552 = vmul.f32 1.0, %v551
  %v553 = vld [vmem:[%s5] sm:$0xff]
  %v555 = vsel %vm399, %v546, 0
  %v558 = vsel %vm399, %v548, 0
  %v561 = vsel %vm399, %v550, 0
  %v564 = vsel %vm399, %v552, 0
  %566 = vmatprep.subr.mxu0 0.0
  %567 = vmatpush1.msra.mxu0 %v553
  %568 = vmatprep.subr.mxu0 0.0
  %569 = vmatpush1.msra.mxu0 0.0
  %570 = vmatprep.subr.mxu0 0.0
  %571 = vmatpush1.msra.mxu0 0.0
  %572 = vmatprep.subr.mxu0 0.0
  %573 = vmatpush1.msra.mxu0 0.0
  %574 = vmatprep.subr.mxu0 0.0
  %575 = vmatpush1.msra.mxu0 0.0
  %576 = vmatprep.subr.mxu0 0.0
  %577 = vmatpush1.msra.mxu0 0.0
  %578 = vmatprep.subr.mxu0 0.0
  %579 = vmatpush1.msra.mxu0 0.0
  %580 = vmatprep.subr.mxu0 0.0
  %581 = vmatpush1.msra.mxu0 0.0
  %582 = vmatprep.subr.mxu0 0.0
  %583 = vmatpush1.msra.mxu0 0.0
  %584 = vmatprep.subr.mxu0 0.0
  %585 = vmatpush1.msra.mxu0 0.0
  %586 = vmatprep.subr.mxu0 0.0
  %587 = vmatpush1.msra.mxu0 0.0
  %588 = vmatprep.subr.mxu0 0.0
  %589 = vmatpush1.msra.mxu0 0.0
  %590 = vmatprep.subr.mxu0 0.0
  %591 = vmatpush1.msra.mxu0 0.0
  %592 = vmatprep.subr.mxu0 0.0
  %593 = vmatpush1.msra.mxu0 0.0
  %594 = vmatprep.subr.mxu0 0.0
  %595 = vmatpush1.msra.mxu0 0.0
  %596 = vmatprep.subr.mxu0 0.0
  %597 = vmatpush1.msra.mxu0 0.0
  %598 = vmatprep.subr.mxu0 0.0
  %599 = vmatpush1.msra.mxu0 0.0
  %600 = vmatprep.subr.mxu0 0.0
  %601 = vmatpush1.msra.mxu0 0.0
  %602 = vmatprep.subr.mxu0 0.0
  %603 = vmatpush1.msra.mxu0 0.0
  %604 = vmatprep.subr.mxu0 0.0
  %605 = vmatpush1.msra.mxu0 0.0
  %606 = vmatprep.subr.mxu0 0.0
  %607 = vmatpush1.msra.mxu0 0.0
  %608 = vmatprep.subr.mxu0 0.0
  %609 = vmatpush1.msra.mxu0 0.0
  %610 = vmatprep.subr.mxu0 0.0
  %611 = vmatpush1.msra.mxu0 0.0
  %612 = vmatprep.subr.mxu0 0.0
  %613 = vmatpush1.msra.mxu0 0.0
  %614 = vmatprep.subr.mxu0 0.0
  %615 = vmatpush1.msra.mxu0 0.0
  %616 = vmatprep.subr.mxu0 0.0
  %617 = vmatpush1.msra.mxu0 0.0
  %618 = vmatprep.subr.mxu0 0.0
  %619 = vmatpush1.msra.mxu0 0.0
  %620 = vmatprep.subr.mxu0 0.0
  %621 = vmatpush1.msra.mxu0 0.0
  %622 = vmatprep.subr.mxu0 0.0
  %623 = vmatpush1.msra.mxu0 0.0
  %624 = vmatprep.subr.mxu0 0.0
  %625 = vmatpush1.msra.mxu0 0.0
  %626 = vmatprep.subr.mxu0 0.0
  %627 = vmatpush1.msra.mxu0 0.0
  %628 = vmatprep.subr.mxu0 0.0
  %629 = vmatpush1.msra.mxu0 0.0
  %630 = vmatprep.mubr.f32.mxu0 0.0
  %631 = vmatmul.mubr.f32.gmra.mrb[0].mxu0 %v555
  %v632 = vpop.f32.mrb[0].mxu0
  %v633 = vadd.f32 0.0, %v632
  %v634 = vpop.f32.mrb[0].mxu0
  %635 = vmatprep.mubr.f32.mxu0 0.0
  %636 = vmatmul.mubr.f32.gmra.mrb[0].mxu0 %v558
  %v637 = vpop.f32.mrb[0].mxu0
  %v638 = vadd.f32 0.0, %v637
  %v639 = vpop.f32.mrb[0].mxu0
  %640 = vmatprep.mubr.f32.mxu0 0.0
  %641 = vmatmul.mubr.f32.gmra.mrb[0].mxu0 %v561
  %v642 = vpop.f32.mrb[0].mxu0
  %v643 = vadd.f32 0.0, %v642
  %v644 = vpop.f32.mrb[0].mxu0
  %645 = vmatprep.mubr.f32.mxu0 0.0
  %646 = vmatmul.mubr.f32.gmra.mrb[0].mxu0 %v564
  %v647 = vpop.f32.mrb[0].mxu0
  %v648 = vadd.f32 0.0, %v647
  %v649 = vpop.f32.mrb[0].mxu0
  %650 = vdwg.mxu0
  %vm651 = vcmask 15360
  %652 = vst.msk [vmem:[%s6] sm:$0xff] %vm651, %v633
  %653 = vst.msk [vmem:[%s6 + $0x8] sm:$0xff] %vm651, %v638
  %654 = vst.msk [vmem:[%s6 + $0x10] sm:$0xff] %vm651, %v643
  %655 = vst.msk [vmem:[%s6 + $0x18] sm:$0xff] %vm651, %v648
  // Predicated region
  $region26: #{dcgan_discriminator_forward.5} parent=0 // pred_check
    _
  $region27: #{dcgan_discriminator_forward.5} parent=0 // pred_check_branch
    %657 = sbr.rel (0) target = $region29
  $region28: #{dcgan_discriminator_forward.5} parent=0 // pred_region
    _
  $region29: #{dcgan_discriminator_forward.5} parent=0 // pred_fallthru
    _
  // Predicated region
  $region30: #{dcgan_discriminator_forward.5} parent=0 // pred_check
    _
  $region31: #{dcgan_discriminator_forward.5} parent=0 // pred_check_branch
    %659 = sbr.rel (0) target = $region33
  $region32: #{dcgan_discriminator_forward.5} parent=0 // pred_region
    _
  $region33: #{dcgan_discriminator_forward.5} parent=0 // pred_fallthru
    _

</llo_original>
